<compile_context>
chip_gen: v7x
topology: tpu7x:2x2x1
jax: 0.10.0
libtpu: 0.0.40
codegen_flags: <defaults>
</compile_context>

<pallas_src>
import functools

import jax
import jax.numpy as jnp
from jax.experimental import pallas as pl
from jax.experimental.pallas import tpu as pltpu

_LANE = 128      # last dims padded to a multiple of the 128-wide lane axis
_SUBLANE = 8     # batch padded to a multiple of the 8-deep sublane axis


def _round_up(v, m):
    return (v + m - 1) // m * m


def _vmem_limit_bytes():
    """Scoped-VMEM ceiling sized per TPU generation with headroom.

    Raises the 16/32 MiB defaults so production-sized blocks compile, while
    staying well under physical capacity (128 MiB v5e/v6e, 64 MiB v7x).
    """
    cap = 64 * 1024 * 1024
    try:
        cap = int(pltpu.get_tpu_info().vmem_capacity_bytes)
    except Exception:  # conservative fallback if the query is unavailable
        pass
    return min(cap - 16 * 1024 * 1024, 100 * 1024 * 1024)


def _pick_batch_tile(n_pad):
    """Batch tile: two tiles when possible so the 'parallel' axis can be split
    across v7x's two TensorCores (harmless on single-TC v5e/v6e)."""
    if n_pad % 16 == 0:
        return n_pad // 2
    return n_pad


def _pick_time_block(seq_len, tn, h_pad, vmem_limit, max_tt=32):
    """Size the recurrence time block so the double-buffered bf16 gx and y
    blocks fit comfortably in the per-generation VMEM budget (decisive on
    v7x's 64 MiB VMEM at production H)."""
    per_step = 2 * (tn * 4 * h_pad * 2) + 2 * (tn * h_pad * 2)  # gx + y, x2 buf
    budget = max(vmem_limit // 2, 1 << 20)
    return max(1, min(seq_len, max_tt, budget // max(per_step, 1)))


# ---------------------------------------------------------------------------
# 1) Hoisted input projection:  gates_x = x2d @ W_ih^T + (b_ih + b_hh)
#    (M, G, K)-tiled bf16 GEMM with an f32 VMEM accumulator (P3 pattern).
# ---------------------------------------------------------------------------
def _input_proj_kernel(x_ref, w_ref, b_ref, o_ref, acc_ref):
    k = pl.program_id(2)

    @pl.when(k == 0)
    def _():
        acc_ref[...] = jnp.zeros_like(acc_ref)

    # bf16 x bf16 -> f32 accumulate: native MXU path on v5e/v6e/v7x.
    acc_ref[...] += jnp.dot(x_ref[...], w_ref[...],
                            preferred_element_type=jnp.float32)

    @pl.when(k == pl.num_programs(2) - 1)
    def _():
        o_ref[...] = (acc_ref[...] + b_ref[...]).astype(o_ref.dtype)


def _input_projection(x2d, wih_t, b, vmem_limit,
                      tm_max=512, tg_max=512, tk_max=512):
    """x2d: (M, D) bf16, wih_t: (D, G) bf16, b: (1, G) f32 -> (M, G) bf16."""
    M, D = x2d.shape
    G = wih_t.shape[1]                 # 4 * H_pad (multiple of 512)
    tm = min(tm_max, M)                # M is a multiple of 8 (padded batch)
    tg = min(tg_max, G)
    tk = min(tk_max, D)                # demo D values (16, H_pad) divide tk
    grid = (pl.cdiv(M, tm), pl.cdiv(G, tg), pl.cdiv(D, tk))
    return pl.pallas_call(
        _input_proj_kernel,
        out_shape=jax.ShapeDtypeStruct((M, G), jnp.bfloat16),
        grid_spec=pltpu.PrefetchScalarGridSpec(
            num_scalar_prefetch=0,
            grid=grid,
            in_specs=[
                pl.BlockSpec((tm, tk), lambda i, j, k: (i, k)),   # x rows
                pl.BlockSpec((tk, tg), lambda i, j, k: (k, j)),   # W_ih^T tile
                pl.BlockSpec((1, tg), lambda i, j, k: (0, j)),    # bias cols
            ],
            out_specs=pl.BlockSpec((tm, tg), lambda i, j, k: (i, j)),
            scratch_shapes=[pltpu.VMEM((tm, tg), jnp.float32)],   # f32 acc
        ),
        compiler_params=pltpu.CompilerParams(
            dimension_semantics=("parallel", "parallel", "arbitrary"),
            vmem_limit_bytes=vmem_limit),
    )(x2d, wih_t, b)


# ---------------------------------------------------------------------------
# 2) Time-blocked recurrence: only h @ W_hh^T + elementwise per step.
#    grid = (batch_tiles [parallel], time_blocks [arbitrary, carries state]).
# ---------------------------------------------------------------------------
def _lstm_recurrence_kernel(hidden_size, tt,
                            len_ref, gx_ref, whh_hbm,
                            y_ref, hN_ref, cN_ref,
                            whh_vmem, h_sc, c_sc):
    H = hidden_size                    # padded hidden (multiple of 128)
    tb = pl.program_id(1)

    @pl.when(tb == 0)
    def _():
        # Stage the loop-invariant recurrent weight ONCE per batch tile into a
        # single-buffered VMEM scratch (avoids the 2x VMEM of auto
        # double-buffering a constant-index block), and zero the carried state.
        pltpu.sync_copy(whh_hbm, whh_vmem)
        h_sc[...] = jnp.zeros_like(h_sc)
        c_sc[...] = jnp.zeros_like(c_sc)

    # Hoist loop-invariant loads out of the inner time loop.
    lens = len_ref[...]                # (tn, 1) int32
    whh = whh_vmem[...]                # (H, 4H) bf16

    def step(i, carry):
        h, c = carry                   # f32 (tn, H): elementwise stays f32
        t = tb * tt + i
        # Input projection was hoisted; only the recurrent matmul remains.
        gates = (gx_ref[i].astype(jnp.float32)
                 + jnp.dot(h.astype(jnp.bfloat16), whh,
                           preferred_element_type=jnp.float32))
        # Lane-aligned gate slices (H is a multiple of 128).
        i_g = jax.nn.sigmoid(gates[:, 0 * H:1 * H])
        f_g = jax.nn.sigmoid(gates[:, 1 * H:2 * H])
        g_g = jnp.tanh(gates[:, 2 * H:3 * H])
        o_g = jax.nn.sigmoid(gates[:, 3 * H:4 * H])

        c_new = f_g * c + i_g * g_g
        h_new = o_g * jnp.tanh(c_new)

        valid = t < lens               # (tn, 1) bool
        # Packed-sequence semantics: state only advances while t < length;
        # this also neutralizes any Pallas-padded gx rows in the tail block.
        h_next = jnp.where(valid, h_new, h)
        c_next = jnp.where(valid, c_new, c)
        # pad_packed_sequence pads with zeros past each sequence's length.
        y_ref[i] = jnp.where(valid, h_new, 0.0).astype(y_ref.dtype)
        return h_next, c_next

    # Partial unroll: enough LLO visibility to overlap loads/stores with the
    # next recurrent matmul without blowing the vreg budget at large H.
    h_fin, c_fin = jax.lax.fori_loop(0, tt, step, (h_sc[...], c_sc[...]),
                                     unroll=4)
    h_sc[...] = h_fin
    c_sc[...] = c_fin

    # Only the last time block's value matters for the resident output blocks.
    @pl.when(tb == pl.num_programs(1) - 1)
    def _():
        hN_ref[...] = h_fin
        cN_ref[...] = c_fin


def _lstm_layer(x, lengths, wih_t, whh_t, b, h_pad):
    """x: (T, N_pad, D_in) bf16, lengths: (N_pad, 1) i32.
    Returns y (T, N_pad, H_pad) bf16, h_n / c_n (N_pad, H_pad) f32."""
    T, n_pad, d_in = x.shape
    g = 4 * h_pad
    vmem_limit = _vmem_limit_bytes()

    # Hoisted, time-parallel input projection (one MXU-saturating bf16 GEMM);
    # gx stays bf16 to halve the HBM round trip into the recurrence.
    gx = _input_projection(x.reshape(T * n_pad, d_in), wih_t, b, vmem_limit)
    gx = gx.reshape(T, n_pad, g)

    tn = _pick_batch_tile(n_pad)
    tt = _pick_time_block(T, tn, h_pad, vmem_limit)
    grid = (n_pad // tn, pl.cdiv(T, tt))
    kernel = functools.partial(_lstm_recurrence_kernel, h_pad, tt)

    y, hN, cN = pl.pallas_call(
        kernel,
        out_shape=(jax.ShapeDtypeStruct((T, n_pad, h_pad), jnp.bfloat16),
                   jax.ShapeDtypeStruct((n_pad, h_pad), jnp.float32),
                   jax.ShapeDtypeStruct((n_pad, h_pad), jnp.float32)),
        grid_spec=pltpu.PrefetchScalarGridSpec(
            num_scalar_prefetch=0,
            grid=grid,
            in_specs=[
                pl.BlockSpec((tn, 1), lambda bi, ti: (bi, 0)),        # lengths
                pl.BlockSpec((tt, tn, g), lambda bi, ti: (ti, bi, 0)),  # gx
                pl.BlockSpec(memory_space=pl.ANY),    # W_hh^T raw HBM ref
            ],
            out_specs=(
                pl.BlockSpec((tt, tn, h_pad), lambda bi, ti: (ti, bi, 0)),
                pl.BlockSpec((tn, h_pad), lambda bi, ti: (bi, 0)),      # h_n
                pl.BlockSpec((tn, h_pad), lambda bi, ti: (bi, 0)),      # c_n
            ),
            scratch_shapes=[
                pltpu.VMEM((h_pad, g), jnp.bfloat16),   # single-buffered W_hh
                pltpu.VMEM((tn, h_pad), jnp.float32),   # h carry (f32)
                pltpu.VMEM((tn, h_pad), jnp.float32),   # c carry (f32)
            ],
        ),
        compiler_params=pltpu.CompilerParams(
            dimension_semantics=("parallel", "arbitrary"),
            vmem_limit_bytes=vmem_limit),
    )(lengths, gx, whh_t)
    return y, hN, cN


# ---------------------------------------------------------------------------
# Parameter padding: per-gate padding of [i, f, g, o] blocks so gate slices at
# k*H_pad stay aligned; padded rows/cols are zero, so padded hidden units stay
# exactly zero and never pollute real lanes.
# ---------------------------------------------------------------------------
def _pad_gate_matrix(w, rows_pad, h, h_pad):
    rows = w.shape[0]
    w4 = w.reshape(rows, 4, h)
    w4 = jnp.pad(w4, ((0, rows_pad - rows), (0, 0), (0, h_pad - h)))
    return w4.reshape(rows_pad, 4 * h_pad)


def _pad_gate_bias(b, h, h_pad):
    b4 = b.reshape(1, 4, h)
    b4 = jnp.pad(b4, ((0, 0), (0, 0), (0, h_pad - h)))
    return b4.reshape(1, 4 * h_pad).astype(jnp.float32)


# ---------------------------------------------------------------------------
# MaskRNN.forward equivalent.
# ---------------------------------------------------------------------------
def mask_rnn_forward(x, output_lengths, total_len, layer_params):
    """x: (T, N, input_size) f32, T == total_len.
    output_lengths: (N,) int32 valid lengths (sorted descending, as PyTorch
    pack_padded_sequence expects).
    layer_params: list of (W_ih^T, W_hh^T, bias) per LSTM layer (f32, unpadded).
    Returns (y, (h_n, c_n)): y (total_len, N, H) f32, h_n/c_n (L, N, H) f32.
    """
    assert x.shape[0] == total_len
    T, N, D = x.shape
    H = layer_params[0][1].shape[0]
    h_pad = _round_up(H, _LANE)
    n_pad = _round_up(N, _SUBLANE)

    # Padded batch rows get length 0 -> frozen at zero state, zero output.
    lengths = jnp.zeros((n_pad, 1), jnp.int32)
    lengths = lengths.at[:N, 0].set(output_lengths.astype(jnp.int32))

    inp = jnp.pad(x, ((0, 0), (0, n_pad - N), (0, 0))).astype(jnp.bfloat16)

    h_list, c_list = [], []
    for li, (wih_t, whh_t, b) in enumerate(layer_params):
        d_in = wih_t.shape[0]
        d_in_pad = d_in if li == 0 else h_pad   # layer>=1 input is padded y
        wih_p = _pad_gate_matrix(wih_t, d_in_pad, H, h_pad).astype(jnp.bfloat16)
        whh_p = _pad_gate_matrix(whh_t, h_pad, H, h_pad).astype(jnp.bfloat16)
        b_p = _pad_gate_bias(b, H, h_pad)
        y, hN, cN = _lstm_layer(inp, lengths, wih_p, whh_p, b_p, h_pad)
        h_list.append(hN[:N, :H])
        c_list.append(cN[:N, :H])
        inp = y                                  # inter-layer y stays bf16
    y_out = inp[:, :N, :H].astype(jnp.float32)
    return y_out, (jnp.stack(h_list, axis=0), jnp.stack(c_list, axis=0))


def init_lstm_params(key, input_size, hidden_size, num_layers):
    """PyTorch-style U(-1/sqrt(H), 1/sqrt(H)) init; biases pre-summed."""
    params = []
    bound = 1.0 / (hidden_size ** 0.5)
    for layer in range(num_layers):
        d_in = input_size if layer == 0 else hidden_size
        key, k1, k2, k3, k4 = jax.random.split(key, 5)
        w_ih = jax.random.uniform(k1, (4 * hidden_size, d_in),
                                  jnp.float32, -bound, bound)
        w_hh = jax.random.uniform(k2, (4 * hidden_size, hidden_size),
                                  jnp.float32, -bound, bound)
        b_ih = jax.random.uniform(k3, (4 * hidden_size,),
                                  jnp.float32, -bound, bound)
        b_hh = jax.random.uniform(k4, (4 * hidden_size,),
                                  jnp.float32, -bound, bound)
        params.append((w_ih.T, w_hh.T, (b_ih + b_hh).reshape(1, -1)))
    return params


def lstm_reference(x, output_lengths, layer_params):
    """Pure-JAX reference (lax.scan) with identical masking semantics and the
    SAME bf16-operand / f32-accumulate numerics as the kernels, so the
    comparison tolerance can stay tight (review's correctness note)."""
    lengths = output_lengths.astype(jnp.int32).reshape(-1, 1)
    T, N, _ = x.shape
    inp = x
    h_list, c_list = [], []
    for (wih_t, whh_t, b) in layer_params:
        H = whh_t.shape[0]
        d_in = wih_t.shape[0]
        wih_bf = wih_t.astype(jnp.bfloat16)
        whh_bf = whh_t.astype(jnp.bfloat16)
        gx = (jnp.dot(inp.reshape(T * N, d_in).astype(jnp.bfloat16), wih_bf,
                      preferred_element_type=jnp.float32) + b)
        gx = gx.astype(jnp.bfloat16).reshape(T, N, 4 * H)

        def step(carry, gx_t, whh_bf=whh_bf, H=H):
            h, c, t = carry
            gates = gx_t.astype(jnp.float32) + jnp.dot(
                h.astype(jnp.bfloat16), whh_bf,
                preferred_element_type=jnp.float32)
            i = jax.nn.sigmoid(gates[:, :H])
            f = jax.nn.sigmoid(gates[:, H:2 * H])
            g = jnp.tanh(gates[:, 2 * H:3 * H])
            o = jax.nn.sigmoid(gates[:, 3 * H:])
            c_new = f * c + i * g
            h_new = o * jnp.tanh(c_new)
            valid = t < lengths
            h2 = jnp.where(valid, h_new, h)
            c2 = jnp.where(valid, c_new, c)
            y = jnp.where(valid, h_new, 0.0).astype(jnp.bfloat16)
            return (h2, c2, t + 1), y

        init = (jnp.zeros((N, H), jnp.float32),
                jnp.zeros((N, H), jnp.float32),
                jnp.int32(0))
        (hN, cN, _), ys = jax.lax.scan(step, init, gx)
        h_list.append(hN)
        c_list.append(cN)
        inp = ys.astype(jnp.float32)
    return inp, (jnp.stack(h_list, 0), jnp.stack(c_list, 0))


if __name__ == "__main__":
    # Small shapes consistent with the module:
    T = 8            # total_len / max sequence length
    N = 2            # batch
    D = 16           # input_size
    H = 32           # hidden_size
    NUM_LAYERS = 2   # rnn_layers

    key = jax.random.PRNGKey(0)
    k_x, k_p = jax.random.split(key)
    x = jax.random.normal(k_x, (T, N, D), jnp.float32)
    output_lengths = jnp.array([8, 5], dtype=jnp.int32)  # sorted descending
    params = init_lstm_params(k_p, D, H, NUM_LAYERS)

    y, (h_n, c_n) = mask_rnn_forward(x, output_lengths, T, params)
    y = jax.block_until_ready(y)
    h_n = jax.block_until_ready(h_n)
    c_n = jax.block_until_ready(c_n)

    # Sanity check against the bf16-matched pure-JAX reference.
    y_ref, (h_ref, c_ref) = lstm_reference(x, output_lengths, params)
    assert y.shape == (T, N, H)
    assert h_n.shape == (NUM_LAYERS, N, H) and c_n.shape == (NUM_LAYERS, N, H)
    assert jnp.allclose(y, y_ref.astype(jnp.float32), atol=2e-2, rtol=2e-2)
    assert jnp.allclose(h_n, h_ref, atol=2e-2, rtol=2e-2)
    assert jnp.allclose(c_n, c_ref, atol=2e-2, rtol=2e-2)

    print("KERNEL_OK")
</pallas_src>

<mosaic_0001>
module attributes {stable_mosaic.version = 11 : i64} {
  func.func @_input_proj_kernel(%arg0: i32, %arg1: i32, %arg2: i32, %arg3: memref<64x16xbf16, #tpu.memory_space<vmem>>, %arg4: memref<16x512xbf16, #tpu.memory_space<vmem>>, %arg5: memref<1x512xf32, #tpu.memory_space<vmem>>, %arg6: memref<64x512xbf16, #tpu.memory_space<vmem>>, %arg7: memref<64x512xf32, #tpu.memory_space<vmem>>) attributes {dimension_semantics = [#tpu.dimension_semantics<parallel>, #tpu.dimension_semantics<parallel>, #tpu.dimension_semantics<arbitrary>], iteration_bounds = array<i64: 1, 1, 1>, scalar_prefetch = 0 : i64, scratch_operands = 1 : i64, tpu.core_type = #tpu.core_type<tc>, window_params = [{transform_indices = @transform_0, window_bounds = array<i64: 64, 16>}, {transform_indices = @transform_1, window_bounds = array<i64: 16, 512>}, {transform_indices = @transform_2, window_bounds = array<i64: 1, 512>}, {transform_indices = @transform_3, window_bounds = array<i64: 64, 512>}]} {
    %c0_i32 = arith.constant 0 : i32
    %0 = arith.cmpi eq, %arg2, %c0_i32 : i32
    %1 = arith.extui %0 : i1 to i32
    %c0_i32_0 = arith.constant 0 : i32
    %2 = arith.cmpi ne, %1, %c0_i32_0 : i32
    scf.if %2 {
      %cst_10 = arith.constant 0.000000e+00 : f32
      %12 = vector.broadcast %cst_10 : f32 to vector<64x512xf32>
      %c0_11 = arith.constant 0 : index
      %c0_12 = arith.constant 0 : index
      %13 = vector.load %arg7[%c0_11, %c0_12] : memref<64x512xf32, #tpu.memory_space<vmem>>, vector<64x512xf32>
      tpu.vector_store %arg7[%c0_11, %c0_12], %12 {strides = array<i32>} : memref<64x512xf32, #tpu.memory_space<vmem>>, vector<64x512xf32>,
    } else {
    }
    %c0 = arith.constant 0 : index
    %c0_1 = arith.constant 0 : index
    %3 = vector.load %arg7[%c0, %c0_1] : memref<64x512xf32, #tpu.memory_space<vmem>>, vector<64x512xf32>
    %c0_2 = arith.constant 0 : index
    %c0_3 = arith.constant 0 : index
    %4 = vector.load %arg3[%c0_2, %c0_3] : memref<64x16xbf16, #tpu.memory_space<vmem>>, vector<64x16xbf16>
    %c0_4 = arith.constant 0 : index
    %c0_5 = arith.constant 0 : index
    %5 = vector.load %arg4[%c0_4, %c0_5] : memref<16x512xbf16, #tpu.memory_space<vmem>>, vector<16x512xbf16>
    %cst = arith.constant dense<0.000000e+00> : vector<64x512xf32>
    %6 = tpu.matmul %4, %5, %cst {dimension_numbers = #tpu.dot_dimension_numbers<[1], [0], [0], [1], [0, 0, 1, 1], [], []>} : vector<64x16xbf16>, vector<16x512xbf16>, vector<64x512xf32> -> vector<64x512xf32>
    %7 = arith.addf %3, %6 : vector<64x512xf32>
    %c0_6 = arith.constant 0 : index
    %c0_7 = arith.constant 0 : index
    %8 = vector.load %arg7[%c0_6, %c0_7] : memref<64x512xf32, #tpu.memory_space<vmem>>, vector<64x512xf32>
    tpu.vector_store %arg7[%c0_6, %c0_7], %7 {strides = array<i32>} : memref<64x512xf32, #tpu.memory_space<vmem>>, vector<64x512xf32>,
    %c0_i32_8 = arith.constant 0 : i32
    %9 = arith.cmpi eq, %arg2, %c0_i32_8 : i32
    %10 = arith.extui %9 : i1 to i32
    %c0_i32_9 = arith.constant 0 : i32
    %11 = arith.cmpi ne, %10, %c0_i32_9 : i32
    scf.if %11 {
      %c0_10 = arith.constant 0 : index
      %c0_11 = arith.constant 0 : index
      %12 = vector.load %arg7[%c0_10, %c0_11] : memref<64x512xf32, #tpu.memory_space<vmem>>, vector<64x512xf32>
      %c0_12 = arith.constant 0 : index
      %c0_13 = arith.constant 0 : index
      %13 = vector.load %arg5[%c0_12, %c0_13] : memref<1x512xf32, #tpu.memory_space<vmem>>, vector<1x512xf32>
      %14 = vector.broadcast %13 : vector<1x512xf32> to vector<64x512xf32>
      %15 = arith.addf %12, %14 : vector<64x512xf32>
      %16 = arith.truncf %15 : vector<64x512xf32> to vector<64x512xbf16>
      %c0_14 = arith.constant 0 : index
      %c0_15 = arith.constant 0 : index
      %17 = vector.load %arg6[%c0_14, %c0_15] : memref<64x512xbf16, #tpu.memory_space<vmem>>, vector<64x512xbf16>
      tpu.vector_store %arg6[%c0_14, %c0_15], %16 {strides = array<i32>} : memref<64x512xbf16, #tpu.memory_space<vmem>>, vector<64x512xbf16>,
    } else {
    }
    return
  }
  func.func @transform_0(%arg0: i32, %arg1: i32, %arg2: i32) -> (i32, i32) {
    %c0_i32 = arith.constant 0 : i32
    return %arg0, %arg2 : i32, i32
  }
  func.func @transform_1(%arg0: i32, %arg1: i32, %arg2: i32) -> (i32, i32) {
    %c0_i32 = arith.constant 0 : i32
    return %arg2, %arg1 : i32, i32
  }
  func.func @transform_2(%arg0: i32, %arg1: i32, %arg2: i32) -> (i32, i32) {
    %c0_i32 = arith.constant 0 : i32
    %c0_i32_0 = arith.constant 0 : i32
    return %c0_i32, %arg1 : i32, i32
  }
  func.func @transform_3(%arg0: i32, %arg1: i32, %arg2: i32) -> (i32, i32) {
    %c0_i32 = arith.constant 0 : i32
    return %arg0, %arg1 : i32, i32
  }
}

</mosaic_0001>

<llo_original>
// kernel: tpu_custom_call.1
$region0: #{tpu_custom_call.1}
  #allocation0 [shape = 'u32[]', space=smem, size = 0x4, offset = 0x4, fixed_abs, tag = 'smem constant byte address 0x4 - core index']
  #allocation1 [shape = 'u32[144,128]{1,0:T(1,128)}', space=vmem, size = 0x12000, scoped, tag = 'internal scratch']
  #allocation2 [shape = 'f32[64,512]{1,0:T(8,128)}', space=vmem, size = 0x20000, scoped, tag = 'scratch operand']
  %s0 = inlined_call_operand.vmem [shape: bf16[64,16], index: 0, kind: input, shape index: {}]
  %s1 = inlined_call_operand.vmem [shape: bf16[16,512], index: 1, kind: input, shape index: {}]
  %s2 = inlined_call_operand.vmem [shape: f32[1,512], index: 2, kind: input, shape index: {}]
  %s3 = inlined_call_operand.hbm [shape: bf16[64,512], index: 3, kind: output, shape index: {}]
  %s4 = sld [smem:[#allocation0]]
  $region30: #{tpu_custom_call.1} parent=0
    _
  %s6 = ssub.s32 1, %s4
  %s7 = scalar_select 0, %s6, %s4
  $region1: #{tpu_custom_call.1} parent=0
    #allocation3 [shape = 'u8[65536]{0}', space=vmem, size = 0x10000, scoped, tag = 'output window, operand 0, single buffered']
    #allocation4 [shape = 's32[1]{0}', space=sflag, size = 0x4, scoped, tag = 'scoped memory for tpu_custom_call.1']
    %8 = vsyncpa [#allocation4], 0
    // Predicated region
    $region2: #{tpu_custom_call.1} parent=1 // pred_check
      _
    $region3: #{tpu_custom_call.1} parent=1 // pred_check_branch
      %10 = sbr.rel (0) target = $region5
    $region4: #{tpu_custom_call.1} parent=1 // pred_region
      _
    $region5: #{tpu_custom_call.1} parent=1 // pred_fallthru
      _
    // Predicated region
    $region6: #{tpu_custom_call.1} parent=1 // pred_check
      _
    $region7: #{tpu_custom_call.1} parent=1 // pred_check_branch
      %12 = sbr.rel (0) target = $region9
    $region8: #{tpu_custom_call.1} parent=1 // pred_region
      _
    $region9: #{tpu_custom_call.1} parent=1 // pred_fallthru
      _
    // Predicated region
    $region10: #{tpu_custom_call.1} parent=1 // pred_check
      _
    $region11: #{tpu_custom_call.1} parent=1 // pred_check_branch
      %14 = sbr.rel (0) target = $region13
    $region12: #{tpu_custom_call.1} parent=1 // pred_region
      _
    $region13: #{tpu_custom_call.1} parent=1 // pred_fallthru
      _
    %p16 = scmp.eq.s32.totalorder 0, 0
    // Predicated region
    $region14: #{tpu_custom_call.1} parent=1 // pred_check
      %p17 = pneg %p16
    $region15: #{tpu_custom_call.1} parent=1 // pred_check_branch
      %19 = sbr.rel (%p17) target = $region17
    $region16: #{tpu_custom_call.1} parent=1 // pred_region
      %20 = vst [vmem:[#allocation2] sm:$0xff] 0.0
      %21 = vst [vmem:[#allocation2 + $0x8] sm:$0xff] 0.0
      %22 = vst [vmem:[#allocation2 + $0x10] sm:$0xff] 0.0
      %23 = vst [vmem:[#allocation2 + $0x18] sm:$0xff] 0.0
      %24 = vst [vmem:[#allocation2 + $0x20] sm:$0xff] 0.0
      %25 = vst [vmem:[#allocation2 + $0x28] sm:$0xff] 0.0
      %26 = vst [vmem:[#allocation2 + $0x30] sm:$0xff] 0.0
      %27 = vst [vmem:[#allocation2 + $0x38] sm:$0xff] 0.0
      %28 = vst [vmem:[#allocation2 + $0x40] sm:$0xff] 0.0
      %29 = vst [vmem:[#allocation2 + $0x48] sm:$0xff] 0.0
      %30 = vst [vmem:[#allocation2 + $0x50] sm:$0xff] 0.0
      %31 = vst [vmem:[#allocation2 + $0x58] sm:$0xff] 0.0
      %32 = vst [vmem:[#allocation2 + $0x60] sm:$0xff] 0.0
      %33 = vst [vmem:[#allocation2 + $0x68] sm:$0xff] 0.0
      %34 = vst [vmem:[#allocation2 + $0x70] sm:$0xff] 0.0
      %35 = vst [vmem:[#allocation2 + $0x78] sm:$0xff] 0.0
      %36 = vst [vmem:[#allocation2 + $0x80] sm:$0xff] 0.0
      %37 = vst [vmem:[#allocation2 + $0x88] sm:$0xff] 0.0
      %38 = vst [vmem:[#allocation2 + $0x90] sm:$0xff] 0.0
      %39 = vst [vmem:[#allocation2 + $0x98] sm:$0xff] 0.0
      %40 = vst [vmem:[#allocation2 + $0xa0] sm:$0xff] 0.0
      %41 = vst [vmem:[#allocation2 + $0xa8] sm:$0xff] 0.0
      %42 = vst [vmem:[#allocation2 + $0xb0] sm:$0xff] 0.0
      %43 = vst [vmem:[#allocation2 + $0xb8] sm:$0xff] 0.0
      %44 = vst [vmem:[#allocation2 + $0xc0] sm:$0xff] 0.0
      %45 = vst [vmem:[#allocation2 + $0xc8] sm:$0xff] 0.0
      %46 = vst [vmem:[#allocation2 + $0xd0] sm:$0xff] 0.0
      %47 = vst [vmem:[#allocation2 + $0xd8] sm:$0xff] 0.0
      %48 = vst [vmem:[#allocation2 + $0xe0] sm:$0xff] 0.0
      %49 = vst [vmem:[#allocation2 + $0xe8] sm:$0xff] 0.0
      %50 = vst [vmem:[#allocation2 + $0xf0] sm:$0xff] 0.0
      %51 = vst [vmem:[#allocation2 + $0xf8] sm:$0xff] 0.0
    $region17: #{tpu_custom_call.1} parent=1 // pred_fallthru
      _
    %v52 = vld [vmem:[#allocation2] sm:$0xff]
    %v53 = vld [vmem:[#allocation2 + $0x8] sm:$0xff]
    %v54 = vld [vmem:[#allocation2 + $0x10] sm:$0xff]
    %v55 = vld [vmem:[#allocation2 + $0x18] sm:$0xff]
    %v56 = vld [vmem:[#allocation2 + $0x20] sm:$0xff]
    %v57 = vld [vmem:[#allocation2 + $0x28] sm:$0xff]
    %v58 = vld [vmem:[#allocation2 + $0x30] sm:$0xff]
    %v59 = vld [vmem:[#allocation2 + $0x38] sm:$0xff]
    %v60 = vld [vmem:[#allocation2 + $0x40] sm:$0xff]
    %v61 = vld [vmem:[#allocation2 + $0x48] sm:$0xff]
    %v62 = vld [vmem:[#allocation2 + $0x50] sm:$0xff]
    %v63 = vld [vmem:[#allocation2 + $0x58] sm:$0xff]
    %v64 = vld [vmem:[#allocation2 + $0x60] sm:$0xff]
    %v65 = vld [vmem:[#allocation2 + $0x68] sm:$0xff]
    %v66 = vld [vmem:[#allocation2 + $0x70] sm:$0xff]
    %v67 = vld [vmem:[#allocation2 + $0x78] sm:$0xff]
    %v68 = vld [vmem:[#allocation2 + $0x80] sm:$0xff]
    %v69 = vld [vmem:[#allocation2 + $0x88] sm:$0xff]
    %v70 = vld [vmem:[#allocation2 + $0x90] sm:$0xff]
    %v71 = vld [vmem:[#allocation2 + $0x98] sm:$0xff]
    %v72 = vld [vmem:[#allocation2 + $0xa0] sm:$0xff]
    %v73 = vld [vmem:[#allocation2 + $0xa8] sm:$0xff]
    %v74 = vld [vmem:[#allocation2 + $0xb0] sm:$0xff]
    %v75 = vld [vmem:[#allocation2 + $0xb8] sm:$0xff]
    %v76 = vld [vmem:[#allocation2 + $0xc0] sm:$0xff]
    %v77 = vld [vmem:[#allocation2 + $0xc8] sm:$0xff]
    %v78 = vld [vmem:[#allocation2 + $0xd0] sm:$0xff]
    %v79 = vld [vmem:[#allocation2 + $0xd8] sm:$0xff]
    %v80 = vld [vmem:[#allocation2 + $0xe0] sm:$0xff]
    %v81 = vld [vmem:[#allocation2 + $0xe8] sm:$0xff]
    %v82 = vld [vmem:[#allocation2 + $0xf0] sm:$0xff]
    %v83 = vld [vmem:[#allocation2 + $0xf8] sm:$0xff]
    %v84 = vld [vmem:[%s0] sm:$0xf]
    %v85 = vld [vmem:[%s0 + $0x4] sm:$0xf]
    %v86 = vld [vmem:[%s0 + $0x8] sm:$0xf]
    %v87 = vld [vmem:[%s0 + $0xc] sm:$0xf]
    %v88 = vld [vmem:[%s0 + $0x10] sm:$0xf]
    %v89 = vld [vmem:[%s0 + $0x14] sm:$0xf]
    %v90 = vld [vmem:[%s0 + $0x18] sm:$0xf]
    %v91 = vld [vmem:[%s0 + $0x1c] sm:$0xf]
    %v92 = vld [vmem:[%s1] sm:$0xff]
    %v93 = vld [vmem:[%s1 + $0x8] sm:$0xff]
    %v94 = vld [vmem:[%s1 + $0x10] sm:$0xff]
    %v95 = vld [vmem:[%s1 + $0x18] sm:$0xff]
    %v104 = vunpack.c.l.b16 %v84
    %v105 = vunpack.c.l.b16 %v85
    %v106 = vunpack.c.l.b16 %v86
    %v107 = vunpack.c.l.b16 %v87
    %v108 = vunpack.c.l.b16 %v88
    %v109 = vunpack.c.l.b16 %v89
    %v110 = vunpack.c.l.b16 %v90
    %v111 = vunpack.c.l.b16 %v91
    %v112 = vpack.c.b16 %v105, %v104
    %v113 = vpack.c.b16 %v107, %v106
    %v114 = vpack.c.b16 %v109, %v108
    %v115 = vpack.c.b16 %v111, %v110
    %v120 = vunpack.c.l.b16 %v92
    %v121 = vunpack.c.h.b16 %v92
    %v122 = vunpack.c.l.b16 %v93
    %v123 = vunpack.c.h.b16 %v93
    %v124 = vunpack.c.l.b16 %v94
    %v125 = vunpack.c.h.b16 %v94
    %v126 = vunpack.c.l.b16 %v95
    %v127 = vunpack.c.h.b16 %v95
    %v128 = vpack.c.b16 %v124, %v120
    %v129 = vpack.c.b16 %v125, %v121
    %v130 = vpack.c.b16 %v126, %v122
    %v131 = vpack.c.b16 %v127, %v123
    %vm136 = vcmask 130048
    %v138 = vsel %vm136, %v112, 0
    %v141 = vsel %vm136, %v113, 0
    %v144 = vsel %vm136, %v114, 0
    %v147 = vsel %vm136, %v115, 0
    %149 = vmatprep.subr.bf16.mxu0 %v129
    %150 = vmatpush1.bf16.msra.mxu0 %v128
    %151 = vmatprep.subr.bf16.mxu0 0
    %152 = vmatpush1.bf16.msra.mxu0 0
    %153 = vmatprep.subr.bf16.mxu0 0
    %154 = vmatpush1.bf16.msra.mxu0 0
    %155 = vmatprep.subr.bf16.mxu0 0
    %156 = vmatpush1.bf16.msra.mxu0 0
    %157 = vmatprep.subr.bf16.mxu0 0
    %158 = vmatpush1.bf16.msra.mxu0 0
    %159 = vmatprep.subr.bf16.mxu0 0
    %160 = vmatpush1.bf16.msra.mxu0 0
    %161 = vmatprep.subr.bf16.mxu0 0
    %162 = vmatpush1.bf16.msra.mxu0 0
    %163 = vmatprep.subr.bf16.mxu0 0
    %164 = vmatpush1.bf16.msra.mxu0 0
    %165 = vmatprep.subr.bf16.mxu0 0
    %166 = vmatpush1.bf16.msra.mxu0 0
    %167 = vmatprep.subr.bf16.mxu0 0
    %168 = vmatpush1.bf16.msra.mxu0 0
    %169 = vmatprep.subr.bf16.mxu0 0
    %170 = vmatpush1.bf16.msra.mxu0 0
    %171 = vmatprep.subr.bf16.mxu0 0
    %172 = vmatpush1.bf16.msra.mxu0 0
    %173 = vmatprep.subr.bf16.mxu0 0
    %174 = vmatpush1.bf16.msra.mxu0 0
    %175 = vmatprep.subr.bf16.mxu0 0
    %176 = vmatpush1.bf16.msra.mxu0 0
    %177 = vmatprep.subr.bf16.mxu0 0
    %178 = vmatpush1.bf16.msra.mxu0 0
    %179 = vmatprep.subr.bf16.mxu0 0
    %180 = vmatpush1.bf16.msra.mxu0 0
    %181 = vmatprep.mubr.bf16.mxu0 0
    %182 = vmatmul.mubr.bf16.gmra.mrb[0].mxu0 %v138
    %v183 = vpop.f32.mrb[0].mxu0
    %v184 = vadd.f32 0.0, %v183
    %v185 = vpop.f32.mrb[0].mxu0
    %v186 = vadd.f32 0.0, %v185
    %v187 = vpop.f32.mrb[0].mxu0
    %v188 = vadd.f32 0.0, %v187
    %v189 = vpop.f32.mrb[0].mxu0
    %v190 = vadd.f32 0.0, %v189
    %191 = vmatprep.mubr.bf16.mxu0 0
    %192 = vmatmul.mubr.bf16.gmra.mrb[0].mxu0 %v141
    %v193 = vpop.f32.mrb[0].mxu0
    %v194 = vadd.f32 0.0, %v193
    %v195 = vpop.f32.mrb[0].mxu0
    %v196 = vadd.f32 0.0, %v195
    %v197 = vpop.f32.mrb[0].mxu0
    %v198 = vadd.f32 0.0, %v197
    %v199 = vpop.f32.mrb[0].mxu0
    %v200 = vadd.f32 0.0, %v199
    %201 = vmatprep.mubr.bf16.mxu0 0
    %202 = vmatmul.mubr.bf16.gmra.mrb[0].mxu0 %v144
    %v203 = vpop.f32.mrb[0].mxu0
    %v204 = vadd.f32 0.0, %v203
    %v205 = vpop.f32.mrb[0].mxu0
    %v206 = vadd.f32 0.0, %v205
    %v207 = vpop.f32.mrb[0].mxu0
    %v208 = vadd.f32 0.0, %v207
    %v209 = vpop.f32.mrb[0].mxu0
    %v210 = vadd.f32 0.0, %v209
    %211 = vmatprep.mubr.bf16.mxu0 0
    %212 = vmatmul.mubr.bf16.gmra.mrb[0].mxu0 %v147
    %v213 = vpop.f32.mrb[0].mxu0
    %v214 = vadd.f32 0.0, %v213
    %v215 = vpop.f32.mrb[0].mxu0
    %v216 = vadd.f32 0.0, %v215
    %v217 = vpop.f32.mrb[0].mxu0
    %v218 = vadd.f32 0.0, %v217
    %v219 = vpop.f32.mrb[0].mxu0
    %v220 = vadd.f32 0.0, %v219
    %221 = vdwg.mxu0
    %222 = vmatprep.subr.bf16.mxu0 %v131
    %223 = vmatpush1.bf16.msra.mxu0 %v130
    %224 = vmatprep.subr.bf16.mxu0 0
    %225 = vmatpush1.bf16.msra.mxu0 0
    %226 = vmatprep.subr.bf16.mxu0 0
    %227 = vmatpush1.bf16.msra.mxu0 0
    %228 = vmatprep.subr.bf16.mxu0 0
    %229 = vmatpush1.bf16.msra.mxu0 0
    %230 = vmatprep.subr.bf16.mxu0 0
    %231 = vmatpush1.bf16.msra.mxu0 0
    %232 = vmatprep.subr.bf16.mxu0 0
    %233 = vmatpush1.bf16.msra.mxu0 0
    %234 = vmatprep.subr.bf16.mxu0 0
    %235 = vmatpush1.bf16.msra.mxu0 0
    %236 = vmatprep.subr.bf16.mxu0 0
    %237 = vmatpush1.bf16.msra.mxu0 0
    %238 = vmatprep.subr.bf16.mxu0 0
    %239 = vmatpush1.bf16.msra.mxu0 0
    %240 = vmatprep.subr.bf16.mxu0 0
    %241 = vmatpush1.bf16.msra.mxu0 0
    %242 = vmatprep.subr.bf16.mxu0 0
    %243 = vmatpush1.bf16.msra.mxu0 0
    %244 = vmatprep.subr.bf16.mxu0 0
    %245 = vmatpush1.bf16.msra.mxu0 0
    %246 = vmatprep.subr.bf16.mxu0 0
    %247 = vmatpush1.bf16.msra.mxu0 0
    %248 = vmatprep.subr.bf16.mxu0 0
    %249 = vmatpush1.bf16.msra.mxu0 0
    %250 = vmatprep.subr.bf16.mxu0 0
    %251 = vmatpush1.bf16.msra.mxu0 0
    %252 = vmatprep.subr.bf16.mxu0 0
    %253 = vmatpush1.bf16.msra.mxu0 0
    %254 = vmatprep.mubr.bf16.mxu0 0
    %255 = vmatmul.mubr.bf16.gmra.mrb[0].mxu0 %v138
    %v256 = vpop.f32.mrb[0].mxu0
    %v257 = vadd.f32 0.0, %v256
    %v258 = vpop.f32.mrb[0].mxu0
    %v259 = vadd.f32 0.0, %v258
    %v260 = vpop.f32.mrb[0].mxu0
    %v261 = vadd.f32 0.0, %v260
    %v262 = vpop.f32.mrb[0].mxu0
    %v263 = vadd.f32 0.0, %v262
    %264 = vmatprep.mubr.bf16.mxu0 0
    %265 = vmatmul.mubr.bf16.gmra.mrb[0].mxu0 %v141
    %v266 = vpop.f32.mrb[0].mxu0
    %v267 = vadd.f32 0.0, %v266
    %v268 = vpop.f32.mrb[0].mxu0
    %v269 = vadd.f32 0.0, %v268
    %v270 = vpop.f32.mrb[0].mxu0
    %v271 = vadd.f32 0.0, %v270
    %v272 = vpop.f32.mrb[0].mxu0
    %v273 = vadd.f32 0.0, %v272
    %274 = vmatprep.mubr.bf16.mxu0 0
    %275 = vmatmul.mubr.bf16.gmra.mrb[0].mxu0 %v144
    %v276 = vpop.f32.mrb[0].mxu0
    %v277 = vadd.f32 0.0, %v276
    %v278 = vpop.f32.mrb[0].mxu0
    %v279 = vadd.f32 0.0, %v278
    %v280 = vpop.f32.mrb[0].mxu0
    %v281 = vadd.f32 0.0, %v280
    %v282 = vpop.f32.mrb[0].mxu0
    %v283 = vadd.f32 0.0, %v282
    %284 = vmatprep.mubr.bf16.mxu0 0
    %285 = vmatmul.mubr.bf16.gmra.mrb[0].mxu0 %v147
    %v286 = vpop.f32.mrb[0].mxu0
    %v287 = vadd.f32 0.0, %v286
    %v288 = vpop.f32.mrb[0].mxu0
    %v289 = vadd.f32 0.0, %v288
    %v290 = vpop.f32.mrb[0].mxu0
    %v291 = vadd.f32 0.0, %v290
    %v292 = vpop.f32.mrb[0].mxu0
    %v293 = vadd.f32 0.0, %v292
    %294 = vdwg.mxu0
    %v295 = vadd.f32 %v52, %v184
    %v296 = vadd.f32 %v53, %v186
    %v297 = vadd.f32 %v54, %v257
    %v298 = vadd.f32 %v55, %v259
    %v299 = vadd.f32 %v56, %v188
    %v300 = vadd.f32 %v57, %v190
    %v301 = vadd.f32 %v58, %v261
    %v302 = vadd.f32 %v59, %v263
    %v303 = vadd.f32 %v60, %v194
    %v304 = vadd.f32 %v61, %v196
    %v305 = vadd.f32 %v62, %v267
    %v306 = vadd.f32 %v63, %v269
    %v307 = vadd.f32 %v64, %v198
    %v308 = vadd.f32 %v65, %v200
    %v309 = vadd.f32 %v66, %v271
    %v310 = vadd.f32 %v67, %v273
    %v311 = vadd.f32 %v68, %v204
    %v312 = vadd.f32 %v69, %v206
    %v313 = vadd.f32 %v70, %v277
    %v314 = vadd.f32 %v71, %v279
    %v315 = vadd.f32 %v72, %v208
    %v316 = vadd.f32 %v73, %v210
    %v317 = vadd.f32 %v74, %v281
    %v318 = vadd.f32 %v75, %v283
    %v319 = vadd.f32 %v76, %v214
    %v320 = vadd.f32 %v77, %v216
    %v321 = vadd.f32 %v78, %v287
    %v322 = vadd.f32 %v79, %v289
    %v323 = vadd.f32 %v80, %v218
    %v324 = vadd.f32 %v81, %v220
    %v325 = vadd.f32 %v82, %v291
    %v326 = vadd.f32 %v83, %v293
    %327 = vst [vmem:[#allocation2] sm:$0xff] %v295
    %328 = vst [vmem:[#allocation2 + $0x8] sm:$0xff] %v296
    %329 = vst [vmem:[#allocation2 + $0x10] sm:$0xff] %v297
    %330 = vst [vmem:[#allocation2 + $0x18] sm:$0xff] %v298
    %331 = vst [vmem:[#allocation2 + $0x20] sm:$0xff] %v299
    %332 = vst [vmem:[#allocation2 + $0x28] sm:$0xff] %v300
    %333 = vst [vmem:[#allocation2 + $0x30] sm:$0xff] %v301
    %334 = vst [vmem:[#allocation2 + $0x38] sm:$0xff] %v302
    %335 = vst [vmem:[#allocation2 + $0x40] sm:$0xff] %v303
    %336 = vst [vmem:[#allocation2 + $0x48] sm:$0xff] %v304
    %337 = vst [vmem:[#allocation2 + $0x50] sm:$0xff] %v305
    %338 = vst [vmem:[#allocation2 + $0x58] sm:$0xff] %v306
    %339 = vst [vmem:[#allocation2 + $0x60] sm:$0xff] %v307
    %340 = vst [vmem:[#allocation2 + $0x68] sm:$0xff] %v308
    %341 = vst [vmem:[#allocation2 + $0x70] sm:$0xff] %v309
    %342 = vst [vmem:[#allocation2 + $0x78] sm:$0xff] %v310
    %343 = vst [vmem:[#allocation2 + $0x80] sm:$0xff] %v311
    %344 = vst [vmem:[#allocation2 + $0x88] sm:$0xff] %v312
    %345 = vst [vmem:[#allocation2 + $0x90] sm:$0xff] %v313
    %346 = vst [vmem:[#allocation2 + $0x98] sm:$0xff] %v314
    %347 = vst [vmem:[#allocation2 + $0xa0] sm:$0xff] %v315
    %348 = vst [vmem:[#allocation2 + $0xa8] sm:$0xff] %v316
    %349 = vst [vmem:[#allocation2 + $0xb0] sm:$0xff] %v317
    %350 = vst [vmem:[#allocation2 + $0xb8] sm:$0xff] %v318
    %351 = vst [vmem:[#allocation2 + $0xc0] sm:$0xff] %v319
    %352 = vst [vmem:[#allocation2 + $0xc8] sm:$0xff] %v320
    %353 = vst [vmem:[#allocation2 + $0xd0] sm:$0xff] %v321
    %354 = vst [vmem:[#allocation2 + $0xd8] sm:$0xff] %v322
    %355 = vst [vmem:[#allocation2 + $0xe0] sm:$0xff] %v323
    %356 = vst [vmem:[#allocation2 + $0xe8] sm:$0xff] %v324
    %357 = vst [vmem:[#allocation2 + $0xf0] sm:$0xff] %v325
    %358 = vst [vmem:[#allocation2 + $0xf8] sm:$0xff] %v326
    // Predicated region
    $region18: #{tpu_custom_call.1} parent=1 // pred_check
      %p359 = pneg %p16
    $region19: #{tpu_custom_call.1} parent=1 // pred_check_branch
      %361 = sbr.rel (%p359) target = $region21
    $region20: #{tpu_custom_call.1} parent=1 // pred_region
      %v362 = vld [vmem:[#allocation2] sm:$0xff]
      %v363 = vld [vmem:[#allocation2 + $0x8] sm:$0xff]
      %v364 = vld [vmem:[#allocation2 + $0x10] sm:$0xff]
      %v365 = vld [vmem:[#allocation2 + $0x18] sm:$0xff]
      %v366 = vld [vmem:[#allocation2 + $0x20] sm:$0xff]
      %v367 = vld [vmem:[#allocation2 + $0x28] sm:$0xff]
      %v368 = vld [vmem:[#allocation2 + $0x30] sm:$0xff]
      %v369 = vld [vmem:[#allocation2 + $0x38] sm:$0xff]
      %v370 = vld [vmem:[#allocation2 + $0x40] sm:$0xff]
      %v371 = vld [vmem:[#allocation2 + $0x48] sm:$0xff]
      %v372 = vld [vmem:[#allocation2 + $0x50] sm:$0xff]
      %v373 = vld [vmem:[#allocation2 + $0x58] sm:$0xff]
      %v374 = vld [vmem:[#allocation2 + $0x60] sm:$0xff]
      %v375 = vld [vmem:[#allocation2 + $0x68] sm:$0xff]
      %v376 = vld [vmem:[#allocation2 + $0x70] sm:$0xff]
      %v377 = vld [vmem:[#allocation2 + $0x78] sm:$0xff]
      %v378 = vld [vmem:[#allocation2 + $0x80] sm:$0xff]
      %v379 = vld [vmem:[#allocation2 + $0x88] sm:$0xff]
      %v380 = vld [vmem:[#allocation2 + $0x90] sm:$0xff]
      %v381 = vld [vmem:[#allocation2 + $0x98] sm:$0xff]
      %v382 = vld [vmem:[#allocation2 + $0xa0] sm:$0xff]
      %v383 = vld [vmem:[#allocation2 + $0xa8] sm:$0xff]
      %v384 = vld [vmem:[#allocation2 + $0xb0] sm:$0xff]
      %v385 = vld [vmem:[#allocation2 + $0xb8] sm:$0xff]
      %v386 = vld [vmem:[#allocation2 + $0xc0] sm:$0xff]
      %v387 = vld [vmem:[#allocation2 + $0xc8] sm:$0xff]
      %v388 = vld [vmem:[#allocation2 + $0xd0] sm:$0xff]
      %v389 = vld [vmem:[#allocation2 + $0xd8] sm:$0xff]
      %v390 = vld [vmem:[#allocation2 + $0xe0] sm:$0xff]
      %v391 = vld [vmem:[#allocation2 + $0xe8] sm:$0xff]
      %v392 = vld [vmem:[#allocation2 + $0xf0] sm:$0xff]
      %v393 = vld [vmem:[#allocation2 + $0xf8] sm:$0xff]
      %v394 = vld [vmem:[%s2] sm:$0xf]
      %v396 = vlaneseq
      %v397 = vshrl.u32 %v396, 7
      %v398 = vsub.s32 0, %v397
      %v399 = vrot.slane %v394, %v398
      %v400 = vlaneseq
      %v401 = vshrl.u32 %v400, 7
      %v402 = vsub.s32 1, %v401
      %v403 = vrot.slane %v394, %v402
      %v404 = vlaneseq
      %v405 = vshrl.u32 %v404, 7
      %v406 = vsub.s32 2, %v405
      %v407 = vrot.slane %v394, %v406
      %v408 = vlaneseq
      %v409 = vshrl.u32 %v408, 7
      %v410 = vsub.s32 3, %v409
      %v411 = vrot.slane %v394, %v410
      %v416 = vadd.f32 %v362, %v399
      %v417 = vadd.f32 %v363, %v403
      %v418 = vadd.f32 %v364, %v407
      %v419 = vadd.f32 %v365, %v411
      %v420 = vadd.f32 %v366, %v399
      %v421 = vadd.f32 %v367, %v403
      %v422 = vadd.f32 %v368, %v407
      %v423 = vadd.f32 %v369, %v411
      %v424 = vadd.f32 %v370, %v399
      %v425 = vadd.f32 %v371, %v403
      %v426 = vadd.f32 %v372, %v407
      %v427 = vadd.f32 %v373, %v411
      %v428 = vadd.f32 %v374, %v399
      %v429 = vadd.f32 %v375, %v403
      %v430 = vadd.f32 %v376, %v407
      %v431 = vadd.f32 %v377, %v411
      %v432 = vadd.f32 %v378, %v399
      %v433 = vadd.f32 %v379, %v403
      %v434 = vadd.f32 %v380, %v407
      %v435 = vadd.f32 %v381, %v411
      %v436 = vadd.f32 %v382, %v399
      %v437 = vadd.f32 %v383, %v403
      %v438 = vadd.f32 %v384, %v407
      %v439 = vadd.f32 %v385, %v411
      %v440 = vadd.f32 %v386, %v399
      %v441 = vadd.f32 %v387, %v403
      %v442 = vadd.f32 %v388, %v407
      %v443 = vadd.f32 %v389, %v411
      %v444 = vadd.f32 %v390, %v399
      %v445 = vadd.f32 %v391, %v403
      %v446 = vadd.f32 %v392, %v407
      %v447 = vadd.f32 %v393, %v411
      %v448 = vpack.c.bf16 %v420, %v416
      %v449 = vpack.c.bf16 %v421, %v417
      %v450 = vpack.c.bf16 %v422, %v418
      %v451 = vpack.c.bf16 %v423, %v419
      %v452 = vpack.c.bf16 %v428, %v424
      %v453 = vpack.c.bf16 %v429, %v425
      %v454 = vpack.c.bf16 %v430, %v426
      %v455 = vpack.c.bf16 %v431, %v427
      %v456 = vpack.c.bf16 %v436, %v432
      %v457 = vpack.c.bf16 %v437, %v433
      %v458 = vpack.c.bf16 %v438, %v434
      %v459 = vpack.c.bf16 %v439, %v435
      %v460 = vpack.c.bf16 %v444, %v440
      %v461 = vpack.c.bf16 %v445, %v441
      %v462 = vpack.c.bf16 %v446, %v442
      %v463 = vpack.c.bf16 %v447, %v443
      %v480 = vunpack.c.l.b16 %v448
      %v481 = vunpack.c.l.b16 %v449
      %v482 = vunpack.c.l.b16 %v450
      %v483 = vunpack.c.l.b16 %v451
      %v484 = vunpack.c.h.b16 %v448
      %v485 = vunpack.c.h.b16 %v449
      %v486 = vunpack.c.h.b16 %v450
      %v487 = vunpack.c.h.b16 %v451
      %v488 = vunpack.c.l.b16 %v452
      %v489 = vunpack.c.l.b16 %v453
      %v490 = vunpack.c.l.b16 %v454
      %v491 = vunpack.c.l.b16 %v455
      %v492 = vunpack.c.h.b16 %v452
      %v493 = vunpack.c.h.b16 %v453
      %v494 = vunpack.c.h.b16 %v454
      %v495 = vunpack.c.h.b16 %v455
      %v496 = vunpack.c.l.b16 %v456
      %v497 = vunpack.c.l.b16 %v457
      %v498 = vunpack.c.l.b16 %v458
      %v499 = vunpack.c.l.b16 %v459
      %v500 = vunpack.c.h.b16 %v456
      %v501 = vunpack.c.h.b16 %v457
      %v502 = vunpack.c.h.b16 %v458
      %v503 = vunpack.c.h.b16 %v459
      %v504 = vunpack.c.l.b16 %v460
      %v505 = vunpack.c.l.b16 %v461
      %v506 = vunpack.c.l.b16 %v462
      %v507 = vunpack.c.l.b16 %v463
      %v508 = vunpack.c.h.b16 %v460
      %v509 = vunpack.c.h.b16 %v461
      %v510 = vunpack.c.h.b16 %v462
      %v511 = vunpack.c.h.b16 %v463
      %v512 = vpack.c.b16 %v481, %v480
      %v513 = vpack.c.b16 %v483, %v482
      %v514 = vpack.c.b16 %v485, %v484
      %v515 = vpack.c.b16 %v487, %v486
      %v516 = vpack.c.b16 %v489, %v488
      %v517 = vpack.c.b16 %v491, %v490
      %v518 = vpack.c.b16 %v493, %v492
      %v519 = vpack.c.b16 %v495, %v494
      %v520 = vpack.c.b16 %v497, %v496
      %v521 = vpack.c.b16 %v499, %v498
      %v522 = vpack.c.b16 %v501, %v500
      %v523 = vpack.c.b16 %v503, %v502
      %v524 = vpack.c.b16 %v505, %v504
      %v525 = vpack.c.b16 %v507, %v506
      %v526 = vpack.c.b16 %v509, %v508
      %v527 = vpack.c.b16 %v511, %v510
      %544 = vst [vmem:[#allocation3] sm:$0xff] %v512
      %545 = vst [vmem:[#allocation3 + $0x8] sm:$0xff] %v513
      %546 = vst [vmem:[#allocation3 + $0x10] sm:$0xff] %v514
      %547 = vst [vmem:[#allocation3 + $0x18] sm:$0xff] %v515
      %548 = vst [vmem:[#allocation3 + $0x20] sm:$0xff] %v516
      %549 = vst [vmem:[#allocation3 + $0x28] sm:$0xff] %v517
      %550 = vst [vmem:[#allocation3 + $0x30] sm:$0xff] %v518
      %551 = vst [vmem:[#allocation3 + $0x38] sm:$0xff] %v519
      %552 = vst [vmem:[#allocation3 + $0x40] sm:$0xff] %v520
      %553 = vst [vmem:[#allocation3 + $0x48] sm:$0xff] %v521
      %554 = vst [vmem:[#allocation3 + $0x50] sm:$0xff] %v522
      %555 = vst [vmem:[#allocation3 + $0x58] sm:$0xff] %v523
      %556 = vst [vmem:[#allocation3 + $0x60] sm:$0xff] %v524
      %557 = vst [vmem:[#allocation3 + $0x68] sm:$0xff] %v525
      %558 = vst [vmem:[#allocation3 + $0x70] sm:$0xff] %v526
      %559 = vst [vmem:[#allocation3 + $0x78] sm:$0xff] %v527
    $region21: #{tpu_custom_call.1} parent=1 // pred_fallthru
      _
    // Predicated region
    $region22: #{tpu_custom_call.1} parent=1 // pred_check
      _
    $region23: #{tpu_custom_call.1} parent=1 // pred_check_branch
      %561 = sbr.rel (0) target = $region25
    $region24: #{tpu_custom_call.1} parent=1 // pred_region
      %s563 = ssub.s32 2048, 2048
      %564 = vsyncadd [#allocation4], %s563
      %s565 = sshll.u32 [#allocation3], 4
      %s566 = int_to_ptr.vmem [resolvable:$true] %s565
      %571 = dma.vmem_to_hbm [thread:$0]  %s566, 2048, %s3, [#allocation4], 256, 256, 16
    $region25: #{tpu_custom_call.1} parent=1 // pred_fallthru
      _
    // Predicated region
    $region26: #{tpu_custom_call.1} parent=1 // pred_check
      _
    $region27: #{tpu_custom_call.1} parent=1 // pred_check_branch
      %573 = sbr.rel (0) target = $region29
    $region28: #{tpu_custom_call.1} parent=1 // pred_region
      %574 = dma.done [#allocation4], 2048
    $region29: #{tpu_custom_call.1} parent=1 // pred_fallthru
      _
    %575 = vsyncpa [#allocation4], 1

</llo_original>
